<compile_context>
chip_gen: v7x
topology: tpu7x:2x2x1
jax: 0.10.0
libtpu: 0.0.40
codegen_flags: <defaults>
</compile_context>

<pallas_src>
import jax
import jax.numpy as jnp
from jax import lax
from jax.experimental import pallas as pl
from jax.experimental.pallas import tpu as pltpu


def _round_up(a, b):
    return -(-a // b) * b


def _pick_lane_block():
    """256-lane contraction on v6e/v7x (256-wide MXU); 128 elsewhere."""
    try:
        kind = jax.devices()[0].device_kind.lower()
    except Exception:
        return 128
    if "v6" in kind or "v7" in kind:
        return 256
    return 128


def _make_kernel(lane, sub, n_sub):
    def kernel(inv_norm_ref, risk_ref, cens_ref, loss_ref,
               tri_ref, strict_ref, off_ref, acc_ref, cnz_ref):
        step = pl.program_id(0)

        @pl.when(step == 0)
        def _():
            # Build triangular masks on-chip once (no HBM inputs, no double-buffered
            # windows).  tri[j, c] = 1 iff j <= c  (within-row inclusive prefix).
            ri = lax.broadcasted_iota(jnp.int32, (lane, lane), 0)
            ci = lax.broadcasted_iota(jnp.int32, (lane, lane), 1)
            tri_ref[...] = (ri <= ci).astype(jnp.float32)
            # strict[r, r'] = 1 iff r' < r  (exclusive prefix over rows of a sub-block).
            rs = lax.broadcasted_iota(jnp.int32, (sub, sub), 0)
            cs = lax.broadcasted_iota(jnp.int32, (sub, sub), 1)
            strict_ref[...] = (cs < rs).astype(jnp.float32)
            off_ref[...] = jnp.zeros_like(off_ref)
            acc_ref[...] = jnp.zeros_like(acc_ref)
            cnz_ref[...] = jnp.zeros_like(cnz_ref)

        inv_norm = inv_norm_ref[0]          # SMEM scalar: 1 / max(||risk||_2, 1e-12)
        carry = off_ref[...]                # (1, 1) running cumsum offset

        # Static unrolled loop over <=128-row sub-blocks of this grid step's tile.
        # Keeping the sub-block fixed keeps the strict-triangular matmul O(row_block)
        # instead of O(row_block^2) as the streaming tile grows.
        for s in range(n_sub):
            rk = risk_ref[s * sub:(s + 1) * sub, :]                      # (sub, lane) f32
            cs_f = cens_ref[s * sub:(s + 1) * sub, :].astype(jnp.float32)

            riskmax = rk * inv_norm
            e = jnp.exp(riskmax)                                         # EUP

            # Within-row inclusive prefix sums along the lane axis (MXU).
            cum_row = jnp.dot(e, tri_ref[...], preferred_element_type=jnp.float32)
            row_total = cum_row[:, lane - 1:lane]                        # (sub, 1)

            # Exclusive prefix of per-row totals: small (sub,sub)x(sub,128) matmul;
            # all RHS columns are identical, so column 0 is the per-row offset.
            row_off = jnp.dot(strict_ref[...],
                              jnp.broadcast_to(row_total, (sub, 128)),
                              preferred_element_type=jnp.float32)[:, 0:1]  # (sub, 1)

            cum = cum_row + row_off + carry                              # VPU broadcasts
            log_risk = jnp.log(cum)                                      # EUP

            censored = (riskmax - log_risk) * cs_f
            acc_ref[...] += censored                                     # VPU partial sums
            cnz_ref[...] += (cs_f != 0.0).astype(jnp.float32)

            # Next carry = inclusive sum through the last element of this sub-block.
            carry = cum[sub - 1:sub, lane - 1:lane]                      # (1, 1)

        off_ref[...] = carry

        @pl.when(step == pl.num_programs(0) - 1)
        def _():
            tot = jnp.sum(acc_ref[...], axis=(0, 1), keepdims=True)
            nnz = jnp.sum(cnz_ref[...], axis=(0, 1), keepdims=True)
            # NOTE: all-zero censors -> divide by zero (matches PyTorch behavior).
            loss_ref[...] = -(tot / nnz)

    return kernel


def coxph_loss(sorted_risk, censors, *, lane_block=None, max_row_block=512,
               censor_dtype=jnp.bfloat16):
    """sorted_risk: (N,) or (N, 1); censors: (N,) or (N, 1). Returns scalar f32 loss.

    The flattened sequence is streamed as (row_block, lane) f32 tiles over a sequential
    ("arbitrary") grid axis with a scalar cumsum carry, so N is not limited by VMEM.
    Censors are streamed as `censor_dtype` (default bf16; values are exactly 0/1).
    """
    n = int(sorted_risk.shape[0])
    risk = jnp.asarray(sorted_risk, jnp.float32).reshape(-1)
    cens = jnp.asarray(censors, jnp.float32).reshape(-1)

    # L2 norm over the full (unpadded) sequence (F.normalize dim=0, eps=1e-12),
    # passed as a single SMEM scalar.
    inv_norm = (1.0 / jnp.maximum(jnp.sqrt(jnp.sum(risk * risk)), 1e-12)).reshape(1)

    lane = int(lane_block) if lane_block is not None else _pick_lane_block()
    rows = -(-n // lane)                                           # ceil(N / lane)
    # Inner sub-block rows (per triangular-matmul pass): multiple of 16, <= 128.
    sub = min(128, _round_up(rows, 16), max(16, _round_up(int(max_row_block), 16)))
    # Streaming tile rows per grid step: multiple of sub, ~max_row_block.
    row_block = min(_round_up(max(int(max_row_block), sub), sub), _round_up(rows, sub))
    rows_pad = _round_up(rows, row_block)
    num_blocks = rows_pad // row_block
    n_sub = row_block // sub
    n_pad = rows_pad * lane

    # Flat-tail zero padding is harmless: exp(0)=1 terms feed only padded cumsum
    # positions (padding comes after all real elements) and padded censors are 0.
    risk2d = jnp.pad(risk, (0, n_pad - n)).reshape(rows_pad, lane)
    cens2d = jnp.pad(cens, (0, n_pad - n)).reshape(rows_pad, lane).astype(censor_dtype)

    out = pl.pallas_call(
        _make_kernel(lane, sub, n_sub),
        out_shape=jax.ShapeDtypeStruct((1, 1), jnp.float32),
        grid=(num_blocks,),
        in_specs=[
            pl.BlockSpec(memory_space=pltpu.MemorySpace.SMEM),      # inv_norm (1,)
            pl.BlockSpec((row_block, lane), lambda i: (i, 0)),      # risk chunk (f32)
            pl.BlockSpec((row_block, lane), lambda i: (i, 0)),      # censors chunk (bf16)
        ],
        out_specs=pl.BlockSpec((1, 1), lambda i: (0, 0)),
        scratch_shapes=[
            pltpu.VMEM((lane, lane), jnp.float32),   # tri mask (built at step 0)
            pltpu.VMEM((sub, sub), jnp.float32),     # strict-lower mask (built at step 0)
            pltpu.VMEM((1, 1), jnp.float32),         # running cumsum offset (carry)
            pltpu.VMEM((sub, lane), jnp.float32),    # partial sums of censored LL
            pltpu.VMEM((sub, lane), jnp.float32),    # partial counts of events
        ],
        compiler_params=pltpu.CompilerParams(
            dimension_semantics=("arbitrary",),      # sequential carry over seq chunks
            vmem_limit_bytes=32 * 1024 * 1024,
        ),
    )(inv_norm, risk2d, cens2d)
    return out[0, 0]


def _coxph_loss_ref(sorted_risk, censors):
    """Plain-JAX reference mirroring the PyTorch forward."""
    risk = jnp.asarray(sorted_risk, jnp.float32).reshape(-1)
    cens = jnp.asarray(censors, jnp.float32).reshape(-1)
    norm = jnp.maximum(jnp.sqrt(jnp.sum(risk * risk)), 1e-12)
    riskmax = risk / norm
    log_risk = jnp.log(jnp.cumsum(jnp.exp(riskmax)))
    uncensored = riskmax - log_risk
    censored = uncensored * cens
    return -jnp.sum(censored) / jnp.sum(cens != 0.0).astype(jnp.float32)


if __name__ == "__main__":
    # coxph_loss has no learnable parameters, so there is nothing to initialize.
    key = jax.random.PRNGKey(0)
    k1, k2, k3, k4, k5, k6 = jax.random.split(key, 6)

    # Small case matching the module's expected (N, 1) risk / (N,) censor layout.
    N = 8
    sorted_risk = jnp.sort(jax.random.normal(k1, (N, 1), dtype=jnp.float32), axis=0)
    censors = (jax.random.uniform(k2, (N,)) > 0.5).astype(jnp.float32)
    censors = censors.at[0].set(1.0)   # guarantee at least one event (nonzero divisor)
    loss = coxph_loss(sorted_risk, censors)
    jax.block_until_ready(loss)
    ref = _coxph_loss_ref(sorted_risk, censors)
    assert jnp.allclose(loss, ref, rtol=1e-5, atol=1e-5), (loss, ref)

    # Multi-grid-step case (exercises the cross-step cumsum carry).
    N2 = 6000
    risk2 = jnp.sort(jax.random.normal(k3, (N2, 1), dtype=jnp.float32), axis=0)
    cens2 = (jax.random.uniform(k4, (N2,)) > 0.5).astype(jnp.float32)
    cens2 = cens2.at[0].set(1.0)
    loss2 = coxph_loss(risk2, cens2, max_row_block=16)   # forces num_blocks > 1
    jax.block_until_ready(loss2)
    ref2 = _coxph_loss_ref(risk2, cens2)
    assert jnp.allclose(loss2, ref2, rtol=1e-4, atol=1e-4), (loss2, ref2)

    # Large streaming case with default 512-row tiles (multi sub-block + carry).
    N3 = 100_000
    risk3 = jnp.sort(jax.random.normal(k5, (N3, 1), dtype=jnp.float32), axis=0)
    cens3 = (jax.random.uniform(k6, (N3,)) > 0.5).astype(jnp.float32)
    cens3 = cens3.at[0].set(1.0)
    loss3 = coxph_loss(risk3, cens3)
    jax.block_until_ready(loss3)
    ref3 = _coxph_loss_ref(risk3, cens3)
    assert jnp.allclose(loss3, ref3, rtol=1e-3, atol=1e-3), (loss3, ref3)

    print("KERNEL_OK")
</pallas_src>

<mosaic_0001>
module attributes {stable_mosaic.version = 11 : i64} {
  func.func @kernel(%arg0: i32, %arg1: memref<1xf32, #tpu.memory_space<smem>>, %arg2: memref<16x128xf32, #tpu.memory_space<vmem>>, %arg3: memref<16x128xbf16, #tpu.memory_space<vmem>>, %arg4: memref<1x1xf32, #tpu.memory_space<vmem>>, %arg5: memref<128x128xf32, #tpu.memory_space<vmem>>, %arg6: memref<16x16xf32, #tpu.memory_space<vmem>>, %arg7: memref<1x1xf32, #tpu.memory_space<vmem>>, %arg8: memref<16x128xf32, #tpu.memory_space<vmem>>, %arg9: memref<16x128xf32, #tpu.memory_space<vmem>>) attributes {dimension_semantics = [#tpu.dimension_semantics<arbitrary>], iteration_bounds = array<i64: 1>, scalar_prefetch = 0 : i64, scratch_operands = 5 : i64, tpu.core_type = #tpu.core_type<tc>, window_params = [{transform_indices = @transform_0, window_bounds = array<i64: 1>}, {transform_indices = @transform_1, window_bounds = array<i64: 16, 128>}, {transform_indices = @transform_2, window_bounds = array<i64: 16, 128>}, {pipeline_mode = #tpu.pipeline_mode<synchronous>, transform_indices = @transform_3, window_bounds = array<i64: 1, 1>}]} {
    %c0_i32 = arith.constant 0 : i32
    %0 = arith.cmpi eq, %arg0, %c0_i32 : i32
    %1 = arith.extui %0 : i1 to i32
    %c0_i32_0 = arith.constant 0 : i32
    %2 = arith.cmpi ne, %1, %c0_i32_0 : i32
    scf.if %2 {
      %41 = tpu.iota {dimensions = array<i32: 0>} : vector<128x128xi32>
      %42 = tpu.iota {dimensions = array<i32: 1>} : vector<128x128xi32>
      %43 = arith.cmpi sle, %41, %42 : vector<128x128xi32>
      %44 = arith.extui %43 : vector<128x128xi1> to vector<128x128xi32>
      %45 = arith.sitofp %44 : vector<128x128xi32> to vector<128x128xf32>
      %c0_25 = arith.constant 0 : index
      %c0_26 = arith.constant 0 : index
      %46 = vector.load %arg5[%c0_25, %c0_26] : memref<128x128xf32, #tpu.memory_space<vmem>>, vector<128x128xf32>
      tpu.vector_store %arg5[%c0_25, %c0_26], %45 {strides = array<i32>} : memref<128x128xf32, #tpu.memory_space<vmem>>, vector<128x128xf32>,
      %47 = tpu.iota {dimensions = array<i32: 0>} : vector<16x16xi32>
      %48 = tpu.iota {dimensions = array<i32: 1>} : vector<16x16xi32>
      %49 = arith.cmpi slt, %48, %47 : vector<16x16xi32>
      %50 = arith.extui %49 : vector<16x16xi1> to vector<16x16xi32>
      %51 = arith.sitofp %50 : vector<16x16xi32> to vector<16x16xf32>
      %c0_27 = arith.constant 0 : index
      %c0_28 = arith.constant 0 : index
      %52 = vector.load %arg6[%c0_27, %c0_28] : memref<16x16xf32, #tpu.memory_space<vmem>>, vector<16x16xf32>
      tpu.vector_store %arg6[%c0_27, %c0_28], %51 {strides = array<i32>} : memref<16x16xf32, #tpu.memory_space<vmem>>, vector<16x16xf32>,
      %cst_29 = arith.constant 0.000000e+00 : f32
      %53 = vector.broadcast %cst_29 : f32 to vector<1x1xf32>
      %c0_30 = arith.constant 0 : index
      %c0_31 = arith.constant 0 : index
      %54 = vector.load %arg7[%c0_30, %c0_31] : memref<1x1xf32, #tpu.memory_space<vmem>>, vector<1x1xf32>
      tpu.vector_store %arg7[%c0_30, %c0_31], %53 {strides = array<i32>} : memref<1x1xf32, #tpu.memory_space<vmem>>, vector<1x1xf32>,
      %cst_32 = arith.constant 0.000000e+00 : f32
      %55 = vector.broadcast %cst_32 : f32 to vector<16x128xf32>
      %c0_33 = arith.constant 0 : index
      %c0_34 = arith.constant 0 : index
      %56 = vector.load %arg8[%c0_33, %c0_34] : memref<16x128xf32, #tpu.memory_space<vmem>>, vector<16x128xf32>
      tpu.vector_store %arg8[%c0_33, %c0_34], %55 {strides = array<i32>} : memref<16x128xf32, #tpu.memory_space<vmem>>, vector<16x128xf32>,
      %cst_35 = arith.constant 0.000000e+00 : f32
      %57 = vector.broadcast %cst_35 : f32 to vector<16x128xf32>
      %c0_36 = arith.constant 0 : index
      %c0_37 = arith.constant 0 : index
      %58 = vector.load %arg9[%c0_36, %c0_37] : memref<16x128xf32, #tpu.memory_space<vmem>>, vector<16x128xf32>
      tpu.vector_store %arg9[%c0_36, %c0_37], %57 {strides = array<i32>} : memref<16x128xf32, #tpu.memory_space<vmem>>, vector<16x128xf32>,
    } else {
    }
    %c0 = arith.constant 0 : index
    %3 = memref.load %arg1[%c0] : memref<1xf32, #tpu.memory_space<smem>>
    %c0_1 = arith.constant 0 : index
    %c0_2 = arith.constant 0 : index
    %4 = vector.load %arg7[%c0_1, %c0_2] : memref<1x1xf32, #tpu.memory_space<vmem>>, vector<1x1xf32>
    %c0_3 = arith.constant 0 : index
    %c0_4 = arith.constant 0 : index
    %5 = vector.load %arg2[%c0_3, %c0_4] : memref<16x128xf32, #tpu.memory_space<vmem>>, vector<16x128xf32>
    %c0_5 = arith.constant 0 : index
    %c0_6 = arith.constant 0 : index
    %6 = vector.load %arg3[%c0_5, %c0_6] : memref<16x128xbf16, #tpu.memory_space<vmem>>, vector<16x128xbf16>
    %7 = arith.extf %6 : vector<16x128xbf16> to vector<16x128xf32>
    %8 = vector.broadcast %3 : f32 to vector<16x128xf32>
    %9 = arith.mulf %5, %8 : vector<16x128xf32>
    %10 = math.exp %9 : vector<16x128xf32>
    %c0_7 = arith.constant 0 : index
    %c0_8 = arith.constant 0 : index
    %11 = vector.load %arg5[%c0_7, %c0_8] : memref<128x128xf32, #tpu.memory_space<vmem>>, vector<128x128xf32>
    %cst = arith.constant dense<0.000000e+00> : vector<16x128xf32>
    %12 = tpu.matmul %10, %11, %cst {dimension_numbers = #tpu.dot_dimension_numbers<[1], [0], [0], [1], [0, 0, 1, 1], [], []>} : vector<16x128xf32>, vector<128x128xf32>, vector<16x128xf32> -> vector<16x128xf32>
    %13 = vector.extract_strided_slice %12 {offsets = [0, 127], sizes = [16, 1], strides = [1, 1]} : vector<16x128xf32> to vector<16x1xf32>
    %c0_9 = arith.constant 0 : index
    %c0_10 = arith.constant 0 : index
    %14 = vector.load %arg6[%c0_9, %c0_10] : memref<16x16xf32, #tpu.memory_space<vmem>>, vector<16x16xf32>
    %15 = vector.shape_cast %13 : vector<16x1xf32> to vector<16x1xf32>
    %16 = vector.broadcast %15 : vector<16x1xf32> to vector<16x128xf32>
    %cst_11 = arith.constant dense<0.000000e+00> : vector<16x128xf32>
    %17 = tpu.matmul %14, %16, %cst_11 {dimension_numbers = #tpu.dot_dimension_numbers<[1], [0], [0], [1], [0, 0, 1, 1], [], []>} : vector<16x16xf32>, vector<16x128xf32>, vector<16x128xf32> -> vector<16x128xf32>
    %18 = vector.extract_strided_slice %17 {offsets = [0, 0], sizes = [16, 1], strides = [1, 1]} : vector<16x128xf32> to vector<16x1xf32>
    %19 = vector.broadcast %18 : vector<16x1xf32> to vector<16x128xf32>
    %20 = arith.addf %12, %19 : vector<16x128xf32>
    %21 = vector.broadcast %4 : vector<1x1xf32> to vector<16x128xf32>
    %22 = arith.addf %20, %21 : vector<16x128xf32>
    %23 = math.log %22 : vector<16x128xf32>
    %24 = arith.subf %9, %23 : vector<16x128xf32>
    %25 = arith.mulf %24, %7 : vector<16x128xf32>
    %c0_12 = arith.constant 0 : index
    %c0_13 = arith.constant 0 : index
    %26 = vector.load %arg8[%c0_12, %c0_13] : memref<16x128xf32, #tpu.memory_space<vmem>>, vector<16x128xf32>
    %27 = arith.addf %26, %25 : vector<16x128xf32>
    %c0_14 = arith.constant 0 : index
    %c0_15 = arith.constant 0 : index
    %28 = vector.load %arg8[%c0_14, %c0_15] : memref<16x128xf32, #tpu.memory_space<vmem>>, vector<16x128xf32>
    tpu.vector_store %arg8[%c0_14, %c0_15], %27 {strides = array<i32>} : memref<16x128xf32, #tpu.memory_space<vmem>>, vector<16x128xf32>,
    %c0_16 = arith.constant 0 : index
    %c0_17 = arith.constant 0 : index
    %29 = vector.load %arg9[%c0_16, %c0_17] : memref<16x128xf32, #tpu.memory_space<vmem>>, vector<16x128xf32>
    %cst_18 = arith.constant 0.000000e+00 : f32
    %30 = vector.broadcast %cst_18 : f32 to vector<16x128xf32>
    %31 = arith.cmpf one, %7, %30 : vector<16x128xf32>
    %32 = arith.extui %31 : vector<16x128xi1> to vector<16x128xi32>
    %33 = arith.sitofp %32 : vector<16x128xi32> to vector<16x128xf32>
    %34 = arith.addf %29, %33 : vector<16x128xf32>
    %c0_19 = arith.constant 0 : index
    %c0_20 = arith.constant 0 : index
    %35 = vector.load %arg9[%c0_19, %c0_20] : memref<16x128xf32, #tpu.memory_space<vmem>>, vector<16x128xf32>
    tpu.vector_store %arg9[%c0_19, %c0_20], %34 {strides = array<i32>} : memref<16x128xf32, #tpu.memory_space<vmem>>, vector<16x128xf32>,
    %36 = vector.extract_strided_slice %22 {offsets = [15, 127], sizes = [1, 1], strides = [1, 1]} : vector<16x128xf32> to vector<1x1xf32>
    %c0_21 = arith.constant 0 : index
    %c0_22 = arith.constant 0 : index
    %37 = vector.load %arg7[%c0_21, %c0_22] : memref<1x1xf32, #tpu.memory_space<vmem>>, vector<1x1xf32>
    tpu.vector_store %arg7[%c0_21, %c0_22], %36 {strides = array<i32>} : memref<1x1xf32, #tpu.memory_space<vmem>>, vector<1x1xf32>,
    %c0_i32_23 = arith.constant 0 : i32
    %38 = arith.cmpi eq, %arg0, %c0_i32_23 : i32
    %39 = arith.extui %38 : i1 to i32
    %c0_i32_24 = arith.constant 0 : i32
    %40 = arith.cmpi ne, %39, %c0_i32_24 : i32
    scf.if %40 {
      %c0_25 = arith.constant 0 : index
      %c0_26 = arith.constant 0 : index
      %41 = vector.load %arg8[%c0_25, %c0_26] : memref<16x128xf32, #tpu.memory_space<vmem>>, vector<16x128xf32>
      %42 = vector.shape_cast %41 : vector<16x128xf32> to vector<1x16x128xf32>
      %cst_27 = arith.constant dense<0.000000e+00> : vector<1xf32>
      %43 = vector.multi_reduction <add>, %42, %cst_27 [1, 2] : vector<1x16x128xf32> to vector<1xf32>
      %44 = vector.shape_cast %43 : vector<1xf32> to vector<1x1x1xf32>
      %45 = vector.extract %44[0, 0, 0] : f32 from vector<1x1x1xf32>
      %46 = vector.broadcast %45 : f32 to vector<1x1xf32>
      %c0_28 = arith.constant 0 : index
      %c0_29 = arith.constant 0 : index
      %47 = vector.load %arg9[%c0_28, %c0_29] : memref<16x128xf32, #tpu.memory_space<vmem>>, vector<16x128xf32>
      %48 = vector.shape_cast %47 : vector<16x128xf32> to vector<1x16x128xf32>
      %cst_30 = arith.constant dense<0.000000e+00> : vector<1xf32>
      %49 = vector.multi_reduction <add>, %48, %cst_30 [1, 2] : vector<1x16x128xf32> to vector<1xf32>
      %50 = vector.shape_cast %49 : vector<1xf32> to vector<1x1x1xf32>
      %51 = vector.extract %50[0, 0, 0] : f32 from vector<1x1x1xf32>
      %52 = vector.broadcast %51 : f32 to vector<1x1xf32>
      %53 = arith.divf %46, %52 : vector<1x1xf32>
      %cst_31 = arith.constant 0.000000e+00 : f32
      %54 = vector.broadcast %cst_31 : f32 to vector<1x1xf32>
      %55 = arith.subf %54, %53 : vector<1x1xf32>
      %c0_32 = arith.constant 0 : index
      %c0_33 = arith.constant 0 : index
      %56 = vector.load %arg4[%c0_32, %c0_33] : memref<1x1xf32, #tpu.memory_space<vmem>>, vector<1x1xf32>
      tpu.vector_store %arg4[%c0_32, %c0_33], %55 {strides = array<i32>} : memref<1x1xf32, #tpu.memory_space<vmem>>, vector<1x1xf32>,
    } else {
    }
    return
  }
  func.func @transform_0(%arg0: i32) -> i32 {
    %c0_i32 = arith.constant 0 : i32
    %c0_i32_0 = arith.constant 0 : i32
    return %c0_i32 : i32
  }
  func.func @transform_1(%arg0: i32) -> (i32, i32) {
    %c0_i32 = arith.constant 0 : i32
    %c0_i32_0 = arith.constant 0 : i32
    return %arg0, %c0_i32 : i32, i32
  }
  func.func @transform_2(%arg0: i32) -> (i32, i32) {
    %c0_i32 = arith.constant 0 : i32
    %c0_i32_0 = arith.constant 0 : i32
    return %arg0, %c0_i32 : i32, i32
  }
  func.func @transform_3(%arg0: i32) -> (i32, i32) {
    %c0_i32 = arith.constant 0 : i32
    %c0_i32_0 = arith.constant 0 : i32
    %c0_i32_1 = arith.constant 0 : i32
    return %c0_i32, %c0_i32_0 : i32, i32
  }
}

</mosaic_0001>

<llo_original>
// kernel: tpu_custom_call.1
$region0: #{tpu_custom_call.1}
  #allocation0 [shape = 'u32[]', space=smem, size = 0x4, offset = 0x4, fixed_abs, tag = 'smem constant byte address 0x4 - core index']
  #allocation1 [shape = 'u32[144,128]{1,0:T(1,128)}', space=vmem, size = 0x12000, scoped, tag = 'internal scratch']
  #allocation2 [shape = 'f32[128,128]{1,0:T(8,128)}', space=vmem, size = 0x10000, scoped, tag = 'scratch operand']
  #allocation3 [shape = 'f32[16,16]{1,0:T(8,128)}', space=vmem, size = 0x2000, scoped, tag = 'scratch operand']
  #allocation4 [shape = 'f32[1,1]{1,0:T(1,128)}', space=vmem, size = 0x200, scoped, tag = 'scratch operand']
  #allocation5 [shape = 'f32[16,128]{1,0:T(8,128)}', space=vmem, size = 0x2000, scoped, tag = 'scratch operand']
  #allocation6 [shape = 'f32[16,128]{1,0:T(8,128)}', space=vmem, size = 0x2000, scoped, tag = 'scratch operand']
  #allocation7 [shape = 'f32[1]{0:T(128)S(6)}', space=smem, size = 0x200, scoped, tag = 'scoped memory for tpu_custom_call.1']
  %s0 = inlined_call_operand.<no memory space> [shape: f32[1], index: 0, kind: input, shape index: {}]
  %s1 = inlined_call_operand.hbm [shape: f32[16,128], index: 1, kind: input, shape index: {}]
  %s2 = inlined_call_operand.hbm [shape: bf16[16,128], index: 2, kind: input, shape index: {}]
  %s3 = inlined_call_operand.hbm [shape: f32[1,1], index: 3, kind: output, shape index: {}]
  %s4 = sld [smem:[#allocation0]]
  $region38: #{tpu_custom_call.1} parent=0
    _
  %s6 = ssub.s32 1, %s4
  %s7 = scalar_select 0, %s6, %s4
  %8 = sst [smem:[#allocation7]] %s0
  $region1: #{tpu_custom_call.1} parent=0
    #allocation8 [shape = 'u8[8192]{0}', space=vmem, size = 0x2000, scoped, tag = 'input window, operand 1, single buffered']
    #allocation9 [shape = 's32[1]{0}', space=sflag, size = 0x4, scoped, tag = 'scoped memory for tpu_custom_call.1']
    #allocation10 [shape = 's32[1]{0}', space=sflag, size = 0x4, scoped, tag = 'scoped memory for tpu_custom_call.1']
    #allocation11 [shape = 'u8[4096]{0}', space=vmem, size = 0x1000, scoped, tag = 'input window, operand 2, single buffered']
    #allocation12 [shape = 's32[1]{0}', space=sflag, size = 0x4, scoped, tag = 'scoped memory for tpu_custom_call.1']
    #allocation13 [shape = 'u8[512]{0}', space=vmem, size = 0x400, scoped, tag = 'output window, operand 0, single buffered']
    %9 = vsyncpa [#allocation9], 0
    %10 = vsyncpa [#allocation12], 0
    %11 = vsyncpa [#allocation10], 0
    // Predicated region
    $region2: #{tpu_custom_call.1} parent=1 // pred_check
      _
    $region3: #{tpu_custom_call.1} parent=1 // pred_check_branch
      %13 = sbr.rel (0) target = $region5
    $region4: #{tpu_custom_call.1} parent=1 // pred_region
      _
    $region5: #{tpu_custom_call.1} parent=1 // pred_fallthru
      _
    // Predicated region
    $region6: #{tpu_custom_call.1} parent=1 // pred_check
      _
    $region7: #{tpu_custom_call.1} parent=1 // pred_check_branch
      %15 = sbr.rel (0) target = $region9
    $region8: #{tpu_custom_call.1} parent=1 // pred_region
      %s17 = ssub.s32 256, 256
      %18 = vsyncadd [#allocation9], %s17
      %s19 = sshll.u32 [#allocation8], 4
      %s20 = int_to_ptr.vmem [resolvable:$true] %s19
      %25 = dma.hbm_to_vmem [thread:$0]  %s1, 256, %s20, [#allocation9], 128, 128, 8
    $region9: #{tpu_custom_call.1} parent=1 // pred_fallthru
      _
    // Predicated region
    $region10: #{tpu_custom_call.1} parent=1 // pred_check
      _
    $region11: #{tpu_custom_call.1} parent=1 // pred_check_branch
      %27 = sbr.rel (0) target = $region13
    $region12: #{tpu_custom_call.1} parent=1 // pred_region
      %s29 = ssub.s32 128, 128
      %30 = vsyncadd [#allocation12], %s29
      %s31 = sshll.u32 [#allocation11], 4
      %s32 = int_to_ptr.vmem [resolvable:$true] %s31
      %37 = dma.hbm_to_vmem [thread:$0]  %s2, 128, %s32, [#allocation12], 64, 64, 4
    $region13: #{tpu_custom_call.1} parent=1 // pred_fallthru
      _
    // Predicated region
    $region14: #{tpu_custom_call.1} parent=1 // pred_check
      _
    $region15: #{tpu_custom_call.1} parent=1 // pred_check_branch
      %39 = sbr.rel (0) target = $region17
    $region16: #{tpu_custom_call.1} parent=1 // pred_region
      %40 = dma.done [#allocation9], 256
    $region17: #{tpu_custom_call.1} parent=1 // pred_fallthru
      _
    // Predicated region
    $region18: #{tpu_custom_call.1} parent=1 // pred_check
      _
    $region19: #{tpu_custom_call.1} parent=1 // pred_check_branch
      %42 = sbr.rel (0) target = $region21
    $region20: #{tpu_custom_call.1} parent=1 // pred_region
      %43 = dma.done [#allocation12], 128
    $region21: #{tpu_custom_call.1} parent=1 // pred_fallthru
      _
    %p44 = scmp.eq.s32.totalorder 0, 0
    // Predicated region
    $region22: #{tpu_custom_call.1} parent=1 // pred_check
      %p45 = pneg %p44
    $region23: #{tpu_custom_call.1} parent=1 // pred_check_branch
      %47 = sbr.rel (%p45) target = $region25
    $region24: #{tpu_custom_call.1} parent=1 // pred_region
      %v48 = vlaneseq
      %v49 = vshrl.u32 %v48, 7
      %v50 = vadd.s32 %v49, 8
      %v51 = vadd.s32 %v49, 16
      %v52 = vadd.s32 %v49, 24
      %v53 = vadd.s32 %v49, 32
      %v54 = vadd.s32 %v49, 40
      %v55 = vadd.s32 %v49, 48
      %v56 = vadd.s32 %v49, 56
      %v57 = vadd.s32 %v49, 64
      %v58 = vadd.s32 %v49, 72
      %v59 = vadd.s32 %v49, 80
      %v60 = vadd.s32 %v49, 88
      %v61 = vadd.s32 %v49, 96
      %v62 = vadd.s32 %v49, 104
      %v63 = vadd.s32 %v49, 112
      %v64 = vadd.s32 %v49, 120
      %v65 = vlaneseq
      %v66 = vand.u32 %v65, 127
      %vm67 = vcmp.le.s32.totalorder %v49, %v66
      %vm68 = vcmp.le.s32.totalorder %v50, %v66
      %vm69 = vcmp.le.s32.totalorder %v51, %v66
      %vm70 = vcmp.le.s32.totalorder %v52, %v66
      %vm71 = vcmp.le.s32.totalorder %v53, %v66
      %vm72 = vcmp.le.s32.totalorder %v54, %v66
      %vm73 = vcmp.le.s32.totalorder %v55, %v66
      %vm74 = vcmp.le.s32.totalorder %v56, %v66
      %vm75 = vcmp.le.s32.totalorder %v57, %v66
      %vm76 = vcmp.le.s32.totalorder %v58, %v66
      %vm77 = vcmp.le.s32.totalorder %v59, %v66
      %vm78 = vcmp.le.s32.totalorder %v60, %v66
      %vm79 = vcmp.le.s32.totalorder %v61, %v66
      %vm80 = vcmp.le.s32.totalorder %v62, %v66
      %vm81 = vcmp.le.s32.totalorder %v63, %v66
      %vm82 = vcmp.le.s32.totalorder %v64, %v66
      %v83 = vsel %vm67, 1, 0
      %v84 = vsel %vm68, 1, 0
      %v85 = vsel %vm69, 1, 0
      %v86 = vsel %vm70, 1, 0
      %v87 = vsel %vm71, 1, 0
      %v88 = vsel %vm72, 1, 0
      %v89 = vsel %vm73, 1, 0
      %v90 = vsel %vm74, 1, 0
      %v91 = vsel %vm75, 1, 0
      %v92 = vsel %vm76, 1, 0
      %v93 = vsel %vm77, 1, 0
      %v94 = vsel %vm78, 1, 0
      %v95 = vsel %vm79, 1, 0
      %v96 = vsel %vm80, 1, 0
      %v97 = vsel %vm81, 1, 0
      %v98 = vsel %vm82, 1, 0
      %v99 = vcvt.s32.f32 %v83
      %v100 = vcvt.s32.f32 %v84
      %v101 = vcvt.s32.f32 %v85
      %v102 = vcvt.s32.f32 %v86
      %v103 = vcvt.s32.f32 %v87
      %v104 = vcvt.s32.f32 %v88
      %v105 = vcvt.s32.f32 %v89
      %v106 = vcvt.s32.f32 %v90
      %v107 = vcvt.s32.f32 %v91
      %v108 = vcvt.s32.f32 %v92
      %v109 = vcvt.s32.f32 %v93
      %v110 = vcvt.s32.f32 %v94
      %v111 = vcvt.s32.f32 %v95
      %v112 = vcvt.s32.f32 %v96
      %v113 = vcvt.s32.f32 %v97
      %v114 = vcvt.s32.f32 %v98
      %115 = vst [vmem:[#allocation2] sm:$0xff] %v99
      %116 = vst [vmem:[#allocation2 + $0x8] sm:$0xff] %v100
      %117 = vst [vmem:[#allocation2 + $0x10] sm:$0xff] %v101
      %118 = vst [vmem:[#allocation2 + $0x18] sm:$0xff] %v102
      %119 = vst [vmem:[#allocation2 + $0x20] sm:$0xff] %v103
      %120 = vst [vmem:[#allocation2 + $0x28] sm:$0xff] %v104
      %121 = vst [vmem:[#allocation2 + $0x30] sm:$0xff] %v105
      %122 = vst [vmem:[#allocation2 + $0x38] sm:$0xff] %v106
      %123 = vst [vmem:[#allocation2 + $0x40] sm:$0xff] %v107
      %124 = vst [vmem:[#allocation2 + $0x48] sm:$0xff] %v108
      %125 = vst [vmem:[#allocation2 + $0x50] sm:$0xff] %v109
      %126 = vst [vmem:[#allocation2 + $0x58] sm:$0xff] %v110
      %127 = vst [vmem:[#allocation2 + $0x60] sm:$0xff] %v111
      %128 = vst [vmem:[#allocation2 + $0x68] sm:$0xff] %v112
      %129 = vst [vmem:[#allocation2 + $0x70] sm:$0xff] %v113
      %130 = vst [vmem:[#allocation2 + $0x78] sm:$0xff] %v114
      %vm131 = vcmp.lt.s32.totalorder %v66, %v49
      %vm132 = vcmp.lt.s32.totalorder %v66, %v50
      %v133 = vsel %vm131, 1, 0
      %v134 = vsel %vm132, 1, 0
      %v135 = vcvt.s32.f32 %v133
      %v136 = vcvt.s32.f32 %v134
      %vm137 = vcmask 130048
      %138 = vst.msk [vmem:[#allocation3] sm:$0xff] %vm137, %v135
      %139 = vst.msk [vmem:[#allocation3 + $0x8] sm:$0xff] %vm137, %v136
      %vm140 = vcmask 0
      %141 = vst.msk [vmem:[#allocation4] sm:$0x1] %vm140, 0.0
      %142 = vst [vmem:[#allocation5] sm:$0xff] 0.0
      %143 = vst [vmem:[#allocation5 + $0x8] sm:$0xff] 0.0
      %144 = vst [vmem:[#allocation6] sm:$0xff] 0.0
      %145 = vst [vmem:[#allocation6 + $0x8] sm:$0xff] 0.0
    $region25: #{tpu_custom_call.1} parent=1 // pred_fallthru
      _
    %s146 = sld [smem:[#allocation7]]
    %v147 = vld [vmem:[#allocation4] sm:$0x1]
    %v148 = vld [vmem:[#allocation8] sm:$0xff]
    %v149 = vld [vmem:[#allocation8 + $0x8] sm:$0xff]
    %v150 = vld [vmem:[#allocation11] sm:$0xf]
    %v151 = vld [vmem:[#allocation11 + $0x4] sm:$0xf]
    %v152 = vunpack.c.l.bf16 %v150
    %v153 = vunpack.c.l.bf16 %v151
    %v154 = vstv %s146
    %v155 = vmul.f32 %v148, %v154
    %v156 = vmul.f32 %v149, %v154
    %v157 = vmul.f32 %v155, 1.442695
    %v158 = vpow.pop %v157
    %v159 = vmul.f32 %v156, 1.442695
    %v160 = vpow.pop %v159
    %v161 = vld [vmem:[#allocation2] sm:$0xff]
    %v162 = vld [vmem:[#allocation2 + $0x8] sm:$0xff]
    %v163 = vld [vmem:[#allocation2 + $0x10] sm:$0xff]
    %v164 = vld [vmem:[#allocation2 + $0x18] sm:$0xff]
    %v165 = vld [vmem:[#allocation2 + $0x20] sm:$0xff]
    %v166 = vld [vmem:[#allocation2 + $0x28] sm:$0xff]
    %v167 = vld [vmem:[#allocation2 + $0x30] sm:$0xff]
    %v168 = vld [vmem:[#allocation2 + $0x38] sm:$0xff]
    %v169 = vld [vmem:[#allocation2 + $0x40] sm:$0xff]
    %v170 = vld [vmem:[#allocation2 + $0x48] sm:$0xff]
    %v171 = vld [vmem:[#allocation2 + $0x50] sm:$0xff]
    %v172 = vld [vmem:[#allocation2 + $0x58] sm:$0xff]
    %v173 = vld [vmem:[#allocation2 + $0x60] sm:$0xff]
    %v174 = vld [vmem:[#allocation2 + $0x68] sm:$0xff]
    %v175 = vld [vmem:[#allocation2 + $0x70] sm:$0xff]
    %v176 = vld [vmem:[#allocation2 + $0x78] sm:$0xff]
    %177 = vmatprep.subr.mxu0 0.0
    %178 = vmatpush1.msra.mxu0 %v161
    %179 = vmatprep.subr.mxu0 0.0
    %180 = vmatpush1.msra.mxu0 %v162
    %181 = vmatprep.subr.mxu0 0.0
    %182 = vmatpush1.msra.mxu0 %v163
    %183 = vmatprep.subr.mxu0 0.0
    %184 = vmatpush1.msra.mxu0 %v164
    %185 = vmatprep.subr.mxu0 0.0
    %186 = vmatpush1.msra.mxu0 %v165
    %187 = vmatprep.subr.mxu0 0.0
    %188 = vmatpush1.msra.mxu0 %v166
    %189 = vmatprep.subr.mxu0 0.0
    %190 = vmatpush1.msra.mxu0 %v167
    %191 = vmatprep.subr.mxu0 0.0
    %192 = vmatpush1.msra.mxu0 %v168
    %193 = vmatprep.subr.mxu0 0.0
    %194 = vmatpush1.msra.mxu0 %v169
    %195 = vmatprep.subr.mxu0 0.0
    %196 = vmatpush1.msra.mxu0 %v170
    %197 = vmatprep.subr.mxu0 0.0
    %198 = vmatpush1.msra.mxu0 %v171
    %199 = vmatprep.subr.mxu0 0.0
    %200 = vmatpush1.msra.mxu0 %v172
    %201 = vmatprep.subr.mxu0 0.0
    %202 = vmatpush1.msra.mxu0 %v173
    %203 = vmatprep.subr.mxu0 0.0
    %204 = vmatpush1.msra.mxu0 %v174
    %205 = vmatprep.subr.mxu0 0.0
    %206 = vmatpush1.msra.mxu0 %v175
    %207 = vmatprep.subr.mxu0 0.0
    %208 = vmatpush1.msra.mxu0 %v176
    %209 = vmatprep.subr.mxu0 0.0
    %210 = vmatpush1.msra.mxu0 0.0
    %211 = vmatprep.subr.mxu0 0.0
    %212 = vmatpush1.msra.mxu0 0.0
    %213 = vmatprep.subr.mxu0 0.0
    %214 = vmatpush1.msra.mxu0 0.0
    %215 = vmatprep.subr.mxu0 0.0
    %216 = vmatpush1.msra.mxu0 0.0
    %217 = vmatprep.subr.mxu0 0.0
    %218 = vmatpush1.msra.mxu0 0.0
    %219 = vmatprep.subr.mxu0 0.0
    %220 = vmatpush1.msra.mxu0 0.0
    %221 = vmatprep.subr.mxu0 0.0
    %222 = vmatpush1.msra.mxu0 0.0
    %223 = vmatprep.subr.mxu0 0.0
    %224 = vmatpush1.msra.mxu0 0.0
    %225 = vmatprep.subr.mxu0 0.0
    %226 = vmatpush1.msra.mxu0 0.0
    %227 = vmatprep.subr.mxu0 0.0
    %228 = vmatpush1.msra.mxu0 0.0
    %229 = vmatprep.subr.mxu0 0.0
    %230 = vmatpush1.msra.mxu0 0.0
    %231 = vmatprep.subr.mxu0 0.0
    %232 = vmatpush1.msra.mxu0 0.0
    %233 = vmatprep.subr.mxu0 0.0
    %234 = vmatpush1.msra.mxu0 0.0
    %235 = vmatprep.subr.mxu0 0.0
    %236 = vmatpush1.msra.mxu0 0.0
    %237 = vmatprep.subr.mxu0 0.0
    %238 = vmatpush1.msra.mxu0 0.0
    %239 = vmatprep.subr.mxu0 0.0
    %240 = vmatpush1.msra.mxu0 0.0
    %241 = vmatprep.mubr.f32.mxu0 0.0
    %242 = vmatmul.mubr.f32.gmra.mrb[0].mxu0 %v158
    %v243 = vpop.f32.mrb[0].mxu0
    %v244 = vadd.f32 0.0, %v243
    %v245 = vpop.f32.mrb[0].mxu0
    %246 = vmatprep.mubr.f32.mxu0 0.0
    %247 = vmatmul.mubr.f32.gmra.mrb[0].mxu0 %v160
    %v248 = vpop.f32.mrb[0].mxu0
    %v249 = vadd.f32 0.0, %v248
    %v250 = vpop.f32.mrb[0].mxu0
    %251 = vdwg.mxu0
    %v252 = vld [vmem:[#allocation3] sm:$0xff]
    %v253 = vld [vmem:[#allocation3 + $0x8] sm:$0xff]
    %255 = vset.pattern.permute.xlu0 127
    %256 = vperm.xlu0 %255, %v244
    %v257 = vpop.permute.xlu0 %256
    %260 = vset.pattern.permute.xlu0 127
    %261 = vperm.xlu0 %260, %v249
    %v262 = vpop.permute.xlu0 %261
    %vm264 = vcmask 130048
    %v266 = vsel %vm264, %v252, 0
    %v269 = vsel %vm264, %v253, 0
    %271 = vmatprep.subr.mxu0 0.0
    %272 = vmatpush1.msra.mxu0 %v257
    %273 = vmatprep.subr.mxu0 0.0
    %274 = vmatpush1.msra.mxu0 %v262
    %275 = vmatprep.subr.mxu0 0.0
    %276 = vmatpush1.msra.mxu0 0.0
    %277 = vmatprep.subr.mxu0 0.0
    %278 = vmatpush1.msra.mxu0 0.0
    %279 = vmatprep.subr.mxu0 0.0
    %280 = vmatpush1.msra.mxu0 0.0
    %281 = vmatprep.subr.mxu0 0.0
    %282 = vmatpush1.msra.mxu0 0.0
    %283 = vmatprep.subr.mxu0 0.0
    %284 = vmatpush1.msra.mxu0 0.0
    %285 = vmatprep.subr.mxu0 0.0
    %286 = vmatpush1.msra.mxu0 0.0
    %287 = vmatprep.subr.mxu0 0.0
    %288 = vmatpush1.msra.mxu0 0.0
    %289 = vmatprep.subr.mxu0 0.0
    %290 = vmatpush1.msra.mxu0 0.0
    %291 = vmatprep.subr.mxu0 0.0
    %292 = vmatpush1.msra.mxu0 0.0
    %293 = vmatprep.subr.mxu0 0.0
    %294 = vmatpush1.msra.mxu0 0.0
    %295 = vmatprep.subr.mxu0 0.0
    %296 = vmatpush1.msra.mxu0 0.0
    %297 = vmatprep.subr.mxu0 0.0
    %298 = vmatpush1.msra.mxu0 0.0
    %299 = vmatprep.subr.mxu0 0.0
    %300 = vmatpush1.msra.mxu0 0.0
    %301 = vmatprep.subr.mxu0 0.0
    %302 = vmatpush1.msra.mxu0 0.0
    %303 = vmatprep.subr.mxu0 0.0
    %304 = vmatpush1.msra.mxu0 0.0
    %305 = vmatprep.subr.mxu0 0.0
    %306 = vmatpush1.msra.mxu0 0.0
    %307 = vmatprep.subr.mxu0 0.0
    %308 = vmatpush1.msra.mxu0 0.0
    %309 = vmatprep.subr.mxu0 0.0
    %310 = vmatpush1.msra.mxu0 0.0
    %311 = vmatprep.subr.mxu0 0.0
    %312 = vmatpush1.msra.mxu0 0.0
    %313 = vmatprep.subr.mxu0 0.0
    %314 = vmatpush1.msra.mxu0 0.0
    %315 = vmatprep.subr.mxu0 0.0
    %316 = vmatpush1.msra.mxu0 0.0
    %317 = vmatprep.subr.mxu0 0.0
    %318 = vmatpush1.msra.mxu0 0.0
    %319 = vmatprep.subr.mxu0 0.0
    %320 = vmatpush1.msra.mxu0 0.0
    %321 = vmatprep.subr.mxu0 0.0
    %322 = vmatpush1.msra.mxu0 0.0
    %323 = vmatprep.subr.mxu0 0.0
    %324 = vmatpush1.msra.mxu0 0.0
    %325 = vmatprep.subr.mxu0 0.0
    %326 = vmatpush1.msra.mxu0 0.0
    %327 = vmatprep.subr.mxu0 0.0
    %328 = vmatpush1.msra.mxu0 0.0
    %329 = vmatprep.subr.mxu0 0.0
    %330 = vmatpush1.msra.mxu0 0.0
    %331 = vmatprep.subr.mxu0 0.0
    %332 = vmatpush1.msra.mxu0 0.0
    %333 = vmatprep.subr.mxu0 0.0
    %334 = vmatpush1.msra.mxu0 0.0
    %335 = vmatprep.mubr.f32.mxu0 0.0
    %336 = vmatmul.mubr.f32.gmra.mrb[0].mxu0 %v266
    %v337 = vpop.f32.mrb[0].mxu0
    %v338 = vadd.f32 0.0, %v337
    %v339 = vpop.f32.mrb[0].mxu0
    %340 = vmatprep.mubr.f32.mxu0 0.0
    %341 = vmatmul.mubr.f32.gmra.mrb[0].mxu0 %v269
    %v342 = vpop.f32.mrb[0].mxu0
    %v343 = vadd.f32 0.0, %v342
    %v344 = vpop.f32.mrb[0].mxu0
    %345 = vdwg.mxu0
    %347 = vset.pattern.permute.xlu0 0
    %348 = vperm.xlu0 %347, %v338
    %v349 = vpop.permute.xlu0 %348
    %352 = vset.pattern.permute.xlu0 0
    %353 = vperm.xlu0 %352, %v343
    %v354 = vpop.permute.xlu0 %353
    %v356 = vadd.f32 %v244, %v349
    %v357 = vadd.f32 %v249, %v354
    %v359 = vlaneseq
    %v360 = vshrl.u32 %v359, 7
    %v361 = vsub.s32 0, %v360
    %v362 = vrot.slane %v147, %v361
    %363 = vset.pattern.permute.xlu0 0
    %364 = vperm.xlu0 %363, %v362
    %v365 = vpop.permute.xlu0 %364
    %v367 = vadd.f32 %v356, %v365
    %v368 = vadd.f32 %v357, %v365
    %v369 = vlog2.pop %v367
    %v370 = vmul.f32 %v369, 0.6931472
    %v371 = vlog2.pop %v368
    %v372 = vmul.f32 %v371, 0.6931472
    %v373 = vsub.f32 %v155, %v370
    %v374 = vsub.f32 %v156, %v372
    %v375 = vmul.f32 %v373, %v152
    %v376 = vmul.f32 %v374, %v153
    %v377 = vld [vmem:[#allocation5] sm:$0xff]
    %v378 = vld [vmem:[#allocation5 + $0x8] sm:$0xff]
    %v379 = vadd.f32 %v377, %v375
    %v380 = vadd.f32 %v378, %v376
    %381 = vst [vmem:[#allocation5] sm:$0xff] %v379
    %382 = vst [vmem:[#allocation5 + $0x8] sm:$0xff] %v380
    %v383 = vld [vmem:[#allocation6] sm:$0xff]
    %v384 = vld [vmem:[#allocation6 + $0x8] sm:$0xff]
    %vm385 = vcmp.ne.f32.partialorder %v152, 0.0
    %vm386 = vcmp.ne.f32.partialorder %v153, 0.0
    %v387 = vsel %vm385, 1, 0
    %v388 = vsel %vm386, 1, 0
    %v389 = vcvt.s32.f32 %v387
    %v390 = vcvt.s32.f32 %v388
    %v391 = vadd.f32 %v383, %v389
    %v392 = vadd.f32 %v384, %v390
    %393 = vst [vmem:[#allocation6] sm:$0xff] %v391
    %394 = vst [vmem:[#allocation6 + $0x8] sm:$0xff] %v392
    %396 = vrot.lane.b32.xlu0 %v368, 1
    %v397 = vpop.permute.xlu0 %396
    %vm399 = vcmask 7175
    %400 = vst.msk [vmem:[#allocation4 - $0x7] sm:$0x80] %vm399, %v397
    // Predicated region
    $region26: #{tpu_custom_call.1} parent=1 // pred_check
      %p401 = pneg %p44
    $region27: #{tpu_custom_call.1} parent=1 // pred_check_branch
      %403 = sbr.rel (%p401) target = $region29
    $region28: #{tpu_custom_call.1} parent=1 // pred_region
      %v404 = vld [vmem:[#allocation5] sm:$0xff]
      %v405 = vld [vmem:[#allocation5 + $0x8] sm:$0xff]
      %v406 = vadd.f32 %v404, %v405
      %407 = vadd.xlane.f32.xlu0 %v406
      %v408 = vpop.xlane.xlu0 %407
      %v409 = vrot.slane %v408, 4
      %v410 = vadd.f32 %v408, %v409
      %v411 = vrot.slane %v410, 2
      %v412 = vadd.f32 %v410, %v411
      %v413 = vrot.slane %v412, 1
      %v414 = vadd.f32 %v412, %v413
      %s415 = vtos %v414
      %v416 = vstv %s415
      %v417 = vld [vmem:[#allocation6] sm:$0xff]
      %v418 = vld [vmem:[#allocation6 + $0x8] sm:$0xff]
      %v419 = vadd.f32 %v417, %v418
      %420 = vadd.xlane.f32.xlu0 %v419
      %v421 = vpop.xlane.xlu0 %420
      %v422 = vrot.slane %v421, 4
      %v423 = vadd.f32 %v421, %v422
      %v424 = vrot.slane %v423, 2
      %v425 = vadd.f32 %v423, %v424
      %v426 = vrot.slane %v425, 1
      %v427 = vadd.f32 %v425, %v426
      %s428 = vtos %v427
      %v429 = vstv %s428
      %v430 = vrcp.pop %v429
      %v431 = vmul.f32 %v416, %v430
      %v432 = vsub.f32 0.0, %v431
      %vm433 = vcmask 0
      %434 = vst.msk [vmem:[#allocation13] sm:$0x1] %vm433, %v432
    $region29: #{tpu_custom_call.1} parent=1 // pred_fallthru
      _
    // Predicated region
    $region30: #{tpu_custom_call.1} parent=1 // pred_check
      _
    $region31: #{tpu_custom_call.1} parent=1 // pred_check_branch
      %436 = sbr.rel (0) target = $region33
    $region32: #{tpu_custom_call.1} parent=1 // pred_region
      %s438 = ssub.s32 16, 16
      %439 = vsyncadd [#allocation10], %s438
      %s441 = sshll.u32 [#allocation13], 4
      %s442 = int_to_ptr.vmem [resolvable:$true] %s441
      %444 = dma.vmem_to_hbm [thread:$0]  %s442, 16, %s3, [#allocation10]
    $region33: #{tpu_custom_call.1} parent=1 // pred_fallthru
      _
    // Predicated region
    $region34: #{tpu_custom_call.1} parent=1 // pred_check
      _
    $region35: #{tpu_custom_call.1} parent=1 // pred_check_branch
      %446 = sbr.rel (0) target = $region37
    $region36: #{tpu_custom_call.1} parent=1 // pred_region
      %447 = dma.done [#allocation10], 16
    $region37: #{tpu_custom_call.1} parent=1 // pred_fallthru
      _
    %448 = vsyncpa [#allocation9], 1
    %449 = vsyncpa [#allocation12], 1
    %450 = vsyncpa [#allocation10], 1

</llo_original>
